<compile_context>
chip_gen: v7x
topology: tpu7x:2x2x1
jax: 0.10.0
libtpu: 0.0.40
codegen_flags: <defaults>
</compile_context>

<pallas_src>
import math
import functools

import jax
import jax.numpy as jnp
from jax import lax
from jax.experimental import pallas as pl
from jax.experimental.pallas import tpu as pltpu


def _head_transform_kernel(x_ref, w_ref, b_ref, gamma_ref, beta_ref, o_ref, *,
                           eps, approximate_gelu, matmul_dtype):
    x = x_ref[...]
    if matmul_dtype is not None:
        # bf16 MXU path (weight was cast once on the host); f32 accumulate below.
        x = x.astype(matmul_dtype)

    # Dense: y = x @ W^T + b, f32 accumulation on the MXU.
    h = jnp.dot(x, w_ref[...], preferred_element_type=jnp.float32)
    h = h + b_ref[...].astype(jnp.float32)            # (1, H) broadcasts over rows

    if approximate_gelu:
        # tanh-approx GELU: transcendental runs on the EUP slot, VALU stays free.
        h = jax.nn.gelu(h, approximate=True)
    else:
        # Exact (erf) GELU -- matches PyTorch ACT2FN["gelu"] used by BLIP.
        # TODO(synk): flip approximate_gelu default once numerics are signed off.
        h = 0.5 * h * (1.0 + lax.erf(h * (1.0 / math.sqrt(2.0))))

    # LayerNorm over hidden (last) axis, f32 statistics, biased variance.
    mean = jnp.mean(h, axis=-1, keepdims=True)
    centered = h - mean
    var = jnp.mean(centered * centered, axis=-1, keepdims=True)
    inv = lax.rsqrt(var + eps)                        # single rsqrt, fused epilogue
    out = (centered * inv) * gamma_ref[...].astype(jnp.float32) \
          + beta_ref[...].astype(jnp.float32)

    o_ref[...] = out.astype(o_ref.dtype)


def _vmem_cap_bytes():
    # ~75% of physical VMEM: v7x 64 MiB/TC -> ~48 MiB; v5e/v6e 128 MiB -> 96 MiB
    # (capped at 100 MiB). Fallback is the conservative v7x-safe value.
    try:
        cap = int(pltpu.get_tpu_info().vmem_capacity_bytes)
    except Exception:  # noqa: BLE001 - any failure -> conservative default
        cap = 64 << 20
    return min((cap * 3) // 4, 100 << 20)


def blip_text_prediction_head_transform(x, w_t, b, gamma, beta, *, eps=1e-12,
                                         row_block=512, approximate_gelu=False,
                                         matmul_dtype=None):
    """h = LayerNorm(gelu(x @ w_t + b)).

    x:     [rows, H]   (rows = batch * seq)
    w_t:   [H, H]      dense weight, pre-transposed vs. PyTorch's [out, in]
    b, gamma, beta: [H]
    """
    rows, hidden = x.shape
    assert w_t.shape == (hidden, hidden)
    assert b.shape == gamma.shape == beta.shape == (hidden,)

    out_dtype = x.dtype
    if matmul_dtype is not None:
        w_t = w_t.astype(matmul_dtype)       # one-time host cast of the resident weight

    # --- row tiling ----------------------------------------------------------
    sub = 16 if x.dtype == jnp.bfloat16 else 8        # sublane packing granule

    def _align_up(n):
        return -(-n // sub) * sub

    rb = max(sub, min(int(row_block), _align_up(rows)))
    rb = max(sub, (rb // sub) * sub)                   # sublane-aligned tile

    # v7x has 2 TensorCores: make the "parallel" grid axis have >= 2 steps
    # whenever the row count allows it.
    if rows >= 2 * sub:
        rb = min(rb, _align_up(-(-rows // 2)))

    # --- VMEM budget (includes f32 intermediates) -----------------------------
    x_bytes = x.dtype.itemsize
    w_bytes = w_t.dtype.itemsize

    def _vmem_need(r):
        return (2 * r * hidden * x_bytes            # x tiles (double buffer)
                + 2 * r * hidden * x_bytes          # out tiles (double buffer)
                + 2 * hidden * hidden * w_bytes     # weight buffers (not re-DMAed)
                + 6 * hidden * 4                    # bias / gamma / beta buffers
                + 4 * r * hidden * 4)               # f32 temporaries (h, centered, out)

    cap = _vmem_cap_bytes()
    while rb > sub and _vmem_need(rb) > cap:
        rb = max(sub, ((rb // 2) // sub) * sub)

    grid = pl.cdiv(rows, rb)   # boundary block (if any) is masked by Pallas; no pad copy
    vmem_limit = min(cap, max(int(1.25 * _vmem_need(rb)) + (4 << 20), 16 << 20))

    b2 = b.reshape(1, hidden)
    g2 = gamma.reshape(1, hidden)
    be2 = beta.reshape(1, hidden)

    kernel = functools.partial(_head_transform_kernel, eps=float(eps),
                               approximate_gelu=approximate_gelu,
                               matmul_dtype=matmul_dtype)

    def _const(i):            # grid-resident params: block index never changes
        return (0, 0)

    return pl.pallas_call(
        kernel,
        out_shape=jax.ShapeDtypeStruct((rows, hidden), out_dtype),
        grid=(grid,),
        in_specs=[
            pl.BlockSpec((rb, hidden), lambda i: (i, 0)),     # x tile (pipelined)
            pl.BlockSpec((hidden, hidden), _const),           # W^T (resident)
            pl.BlockSpec((1, hidden), _const),                # bias
            pl.BlockSpec((1, hidden), _const),                # gamma
            pl.BlockSpec((1, hidden), _const),                # beta
        ],
        out_specs=pl.BlockSpec((rb, hidden), lambda i: (i, 0)),
        compiler_params=pltpu.CompilerParams(
            dimension_semantics=("parallel",),        # shards rows across TCs on v7x
            vmem_limit_bytes=int(vmem_limit)),
    )(x, w_t, b2, g2, be2)


def _reference(x, w_t, b, gamma, beta, eps=1e-12):
    h = x.astype(jnp.float32) @ w_t.astype(jnp.float32) + b.astype(jnp.float32)
    h = 0.5 * h * (1.0 + lax.erf(h * (1.0 / math.sqrt(2.0))))
    mean = jnp.mean(h, axis=-1, keepdims=True)
    var = jnp.mean((h - mean) ** 2, axis=-1, keepdims=True)
    return ((h - mean) * lax.rsqrt(var + eps)) * gamma + beta


if __name__ == "__main__":
    # Small correctness config (tune/benchmark at H=768 for real BLIP shapes).
    hidden = 32
    eps = 1e-12

    key = jax.random.PRNGKey(0)
    k_x, k_w, k_b, k_x2 = jax.random.split(key, 4)

    # Deterministic parameter init (nn.Linear-like scale; LN gamma=1, beta=0).
    bound = 1.0 / math.sqrt(hidden)
    w = jax.random.uniform(k_w, (hidden, hidden), minval=-bound, maxval=bound,
                           dtype=jnp.float32)          # PyTorch layout [out, in]
    b = jax.random.uniform(k_b, (hidden,), minval=-bound, maxval=bound,
                           dtype=jnp.float32)
    gamma = jnp.ones((hidden,), dtype=jnp.float32)
    beta = jnp.zeros((hidden,), dtype=jnp.float32)
    w_t = w.T                                          # [in, out]

    # Test 1: exact path; rows tile-aligned, grid clamped to >= 2 steps.
    batch, seq = 2, 8
    x_bsh = jax.random.normal(k_x, (batch, seq, hidden), dtype=jnp.float32)
    x = x_bsh.reshape(batch * seq, hidden)
    out = jax.block_until_ready(
        blip_text_prediction_head_transform(x, w_t, b, gamma, beta, eps=eps))
    ref = _reference(x, w_t, b, gamma, beta, eps=eps)
    assert out.shape == (batch * seq, hidden)
    assert jnp.allclose(out, ref, atol=1e-5, rtol=1e-5), "mismatch (exact path)"
    assert out.reshape(batch, seq, hidden).shape == (batch, seq, hidden)

    # Test 2: rows NOT divisible by the row tile -> masked boundary block (no pad copy).
    rows2 = 14
    x2 = jax.random.normal(k_x2, (rows2, hidden), dtype=jnp.float32)
    out2 = jax.block_until_ready(
        blip_text_prediction_head_transform(x2, w_t, b, gamma, beta, eps=eps,
                                            row_block=8))
    ref2 = _reference(x2, w_t, b, gamma, beta, eps=eps)
    assert out2.shape == (rows2, hidden)
    assert jnp.allclose(out2, ref2, atol=1e-5, rtol=1e-5), "mismatch (boundary path)"

    # Test 3: fast path -- bf16 MXU operands + tanh-approx GELU (bf16-level tolerance).
    out3 = jax.block_until_ready(
        blip_text_prediction_head_transform(x, w_t, b, gamma, beta, eps=eps,
                                            approximate_gelu=True,
                                            matmul_dtype=jnp.bfloat16))
    assert out3.shape == (batch * seq, hidden)
    assert jnp.allclose(out3, ref, atol=5e-2, rtol=5e-2), "mismatch (fast path)"

    print("KERNEL_OK")
</pallas_src>

<mosaic_0001>
module attributes {stable_mosaic.version = 11 : i64} {
  func.func @_head_transform_kernel(%arg0: i32, %arg1: memref<8x32xf32, #tpu.memory_space<vmem>>, %arg2: memref<32x32xf32, #tpu.memory_space<vmem>>, %arg3: memref<1x32xf32, #tpu.memory_space<vmem>>, %arg4: memref<1x32xf32, #tpu.memory_space<vmem>>, %arg5: memref<1x32xf32, #tpu.memory_space<vmem>>, %arg6: memref<8x32xf32, #tpu.memory_space<vmem>>) attributes {dimension_semantics = [#tpu.dimension_semantics<parallel>], iteration_bounds = array<i64: 2>, scalar_prefetch = 0 : i64, scratch_operands = 0 : i64, tpu.core_type = #tpu.core_type<tc>, window_params = [{transform_indices = @transform_0, window_bounds = array<i64: 8, 32>}, {pipeline_mode = #tpu.pipeline_mode<synchronous>, transform_indices = @transform_1, window_bounds = array<i64: 32, 32>}, {pipeline_mode = #tpu.pipeline_mode<synchronous>, transform_indices = @transform_2, window_bounds = array<i64: 1, 32>}, {pipeline_mode = #tpu.pipeline_mode<synchronous>, transform_indices = @transform_3, window_bounds = array<i64: 1, 32>}, {pipeline_mode = #tpu.pipeline_mode<synchronous>, transform_indices = @transform_4, window_bounds = array<i64: 1, 32>}, {transform_indices = @transform_5, window_bounds = array<i64: 8, 32>}]} {
    %c0 = arith.constant 0 : index
    %c0_0 = arith.constant 0 : index
    %0 = vector.load %arg1[%c0, %c0_0] : memref<8x32xf32, #tpu.memory_space<vmem>>, vector<8x32xf32>
    %c0_1 = arith.constant 0 : index
    %c0_2 = arith.constant 0 : index
    %1 = vector.load %arg2[%c0_1, %c0_2] : memref<32x32xf32, #tpu.memory_space<vmem>>, vector<32x32xf32>
    %cst = arith.constant dense<0.000000e+00> : vector<8x32xf32>
    %2 = tpu.matmul %0, %1, %cst {dimension_numbers = #tpu.dot_dimension_numbers<[1], [0], [0], [1], [0, 0, 1, 1], [], []>} : vector<8x32xf32>, vector<32x32xf32>, vector<8x32xf32> -> vector<8x32xf32>
    %c0_3 = arith.constant 0 : index
    %c0_4 = arith.constant 0 : index
    %3 = vector.load %arg3[%c0_3, %c0_4] : memref<1x32xf32, #tpu.memory_space<vmem>>, vector<1x32xf32>
    %4 = vector.broadcast %3 : vector<1x32xf32> to vector<8x32xf32>
    %5 = arith.addf %2, %4 : vector<8x32xf32>
    %cst_5 = arith.constant 5.000000e-01 : f32
    %6 = vector.broadcast %cst_5 : f32 to vector<8x32xf32>
    %7 = arith.mulf %6, %5 : vector<8x32xf32>
    %cst_6 = arith.constant 0.707106769 : f32
    %8 = vector.broadcast %cst_6 : f32 to vector<8x32xf32>
    %9 = arith.mulf %5, %8 : vector<8x32xf32>
    %10 = math.erf %9 : vector<8x32xf32>
    %cst_7 = arith.constant 1.000000e+00 : f32
    %11 = vector.broadcast %cst_7 : f32 to vector<8x32xf32>
    %12 = arith.addf %11, %10 : vector<8x32xf32>
    %13 = arith.mulf %7, %12 : vector<8x32xf32>
    %cst_8 = arith.constant dense<0.000000e+00> : vector<8xf32>
    %14 = vector.multi_reduction <add>, %13, %cst_8 [1] : vector<8x32xf32> to vector<8xf32>
    %15 = vector.shape_cast %14 : vector<8xf32> to vector<8x1xf32>
    %cst_9 = arith.constant 3.200000e+01 : f32
    %16 = vector.broadcast %cst_9 : f32 to vector<8x1xf32>
    %17 = arith.divf %15, %16 : vector<8x1xf32>
    %18 = vector.broadcast %17 : vector<8x1xf32> to vector<8x32xf32>
    %19 = arith.subf %13, %18 : vector<8x32xf32>
    %20 = arith.mulf %19, %19 : vector<8x32xf32>
    %cst_10 = arith.constant dense<0.000000e+00> : vector<8xf32>
    %21 = vector.multi_reduction <add>, %20, %cst_10 [1] : vector<8x32xf32> to vector<8xf32>
    %22 = vector.shape_cast %21 : vector<8xf32> to vector<8x1xf32>
    %cst_11 = arith.constant 3.200000e+01 : f32
    %23 = vector.broadcast %cst_11 : f32 to vector<8x1xf32>
    %24 = arith.divf %22, %23 : vector<8x1xf32>
    %cst_12 = arith.constant 9.99999996E-13 : f32
    %25 = vector.broadcast %cst_12 : f32 to vector<8x1xf32>
    %26 = arith.addf %24, %25 : vector<8x1xf32>
    %27 = math.rsqrt %26 : vector<8x1xf32>
    %28 = vector.broadcast %27 : vector<8x1xf32> to vector<8x32xf32>
    %29 = arith.mulf %19, %28 : vector<8x32xf32>
    %c0_13 = arith.constant 0 : index
    %c0_14 = arith.constant 0 : index
    %30 = vector.load %arg4[%c0_13, %c0_14] : memref<1x32xf32, #tpu.memory_space<vmem>>, vector<1x32xf32>
    %31 = vector.broadcast %30 : vector<1x32xf32> to vector<8x32xf32>
    %32 = arith.mulf %29, %31 : vector<8x32xf32>
    %c0_15 = arith.constant 0 : index
    %c0_16 = arith.constant 0 : index
    %33 = vector.load %arg5[%c0_15, %c0_16] : memref<1x32xf32, #tpu.memory_space<vmem>>, vector<1x32xf32>
    %34 = vector.broadcast %33 : vector<1x32xf32> to vector<8x32xf32>
    %35 = arith.addf %32, %34 : vector<8x32xf32>
    %c0_17 = arith.constant 0 : index
    %c0_18 = arith.constant 0 : index
    %36 = vector.load %arg6[%c0_17, %c0_18] : memref<8x32xf32, #tpu.memory_space<vmem>>, vector<8x32xf32>
    tpu.vector_store %arg6[%c0_17, %c0_18], %35 {strides = array<i32>} : memref<8x32xf32, #tpu.memory_space<vmem>>, vector<8x32xf32>,
    return
  }
  func.func @transform_0(%arg0: i32) -> (i32, i32) {
    %c0_i32 = arith.constant 0 : i32
    %c0_i32_0 = arith.constant 0 : i32
    return %arg0, %c0_i32 : i32, i32
  }
  func.func @transform_1(%arg0: i32) -> (i32, i32) {
    %c0_i32 = arith.constant 0 : i32
    %c0_i32_0 = arith.constant 0 : i32
    %c0_i32_1 = arith.constant 0 : i32
    return %c0_i32, %c0_i32_0 : i32, i32
  }
  func.func @transform_2(%arg0: i32) -> (i32, i32) {
    %c0_i32 = arith.constant 0 : i32
    %c0_i32_0 = arith.constant 0 : i32
    %c0_i32_1 = arith.constant 0 : i32
    return %c0_i32, %c0_i32_0 : i32, i32
  }
  func.func @transform_3(%arg0: i32) -> (i32, i32) {
    %c0_i32 = arith.constant 0 : i32
    %c0_i32_0 = arith.constant 0 : i32
    %c0_i32_1 = arith.constant 0 : i32
    return %c0_i32, %c0_i32_0 : i32, i32
  }
  func.func @transform_4(%arg0: i32) -> (i32, i32) {
    %c0_i32 = arith.constant 0 : i32
    %c0_i32_0 = arith.constant 0 : i32
    %c0_i32_1 = arith.constant 0 : i32
    return %c0_i32, %c0_i32_0 : i32, i32
  }
  func.func @transform_5(%arg0: i32) -> (i32, i32) {
    %c0_i32 = arith.constant 0 : i32
    %c0_i32_0 = arith.constant 0 : i32
    return %arg0, %c0_i32 : i32, i32
  }
}

</mosaic_0001>

<llo_original>
// kernel: tpu_custom_call.1
$region0: #{tpu_custom_call.1}
  #allocation0 [shape = 'u32[]', space=smem, size = 0x4, offset = 0x4, fixed_abs, tag = 'smem constant byte address 0x4 - core index']
  #allocation1 [shape = 'u32[144,128]{1,0:T(1,128)}', space=vmem, size = 0x12000, scoped, tag = 'internal scratch']
  %s0 = inlined_call_operand.hbm [shape: f32[16,32], index: 0, kind: input, shape index: {}]
  %s1 = inlined_call_operand.hbm [shape: f32[32,32], index: 1, kind: input, shape index: {}]
  %s2 = inlined_call_operand.vmem [shape: f32[1,32], index: 2, kind: input, shape index: {}]
  %s3 = inlined_call_operand.vmem [shape: f32[1,32], index: 3, kind: input, shape index: {}]
  %s4 = inlined_call_operand.vmem [shape: f32[1,32], index: 4, kind: input, shape index: {}]
  %s5 = inlined_call_operand.hbm [shape: f32[16,32], index: 5, kind: output, shape index: {}]
  %s6 = sld [smem:[#allocation0]]
  $region61: #{tpu_custom_call.1} parent=0
    _
  %s8 = ssub.s32 1, %s6
  %s9 = scalar_select 0, %s8, %s6
  $region1: #{tpu_custom_call.1} parent=0
    #allocation2 [shape = 'u8[8192]{0}', space=vmem, size = 0x2000, scoped, tag = 'input window, operand 0']
    #allocation3 [shape = 's32[2]{0}', space=sflag, size = 0x8, scoped, tag = 'scoped memory for tpu_custom_call.1']
    #allocation4 [shape = 's32[2]{0}', space=sflag, size = 0x8, scoped, tag = 'scoped memory for tpu_custom_call.1']
    #allocation5 [shape = 'u8[16384]{0}', space=vmem, size = 0x4000, scoped, tag = 'input window, operand 1, single buffered']
    #allocation6 [shape = 's32[1]{0}', space=sflag, size = 0x4, scoped, tag = 'scoped memory for tpu_custom_call.1']
    #allocation7 [shape = 'u8[8192]{0}', space=vmem, size = 0x2000, scoped, tag = 'output window, operand 0']
    %10 = vsyncpa [#allocation3], 0
    %s11 = scalar_lea.sflag [#allocation3], 1
    %12 = vsyncpa %s11, 0
    %13 = vsyncpa [#allocation6], 0
    %14 = vsyncpa [#allocation4], 0
    %s15 = scalar_lea.sflag [#allocation4], 1
    %16 = vsyncpa %s15, 0
    loop: start=0, step=1, limit=4
    $region2: #{tpu_custom_call.1} parent=1 // loop_pre_header
      _
    $region3: #{tpu_custom_call.1} parent=1 // loop_header
      %s18 = sphi 0, %s22
      %p19 = scmp.ge.s32.totalorder %s18, 4
      %s28 = sphi 0, %s30
      %s31 = sphi 0, %s28
      %s32 = sphi 0, %s31
      %s48 = sphi 0, %s32
      %s52 = sphi 0, %s52
      %s54 = sphi 0, %s52
      %s55 = sphi 0, %s54
      %s69 = sphi 0, %s55
      %s73 = sphi 0, %s73
      %s75 = sphi 0, %s73
      %s76 = sphi 0, %s75
      %s90 = sphi 0, %s76
      %s94 = sphi 0, %s94
      %s96 = sphi 0, %s94
      %s97 = sphi 0, %s96
      %s111 = sphi 0, %s97
      %s115 = sphi 0, %s115
      %s117 = sphi 0, %s115
      %s118 = sphi 0, %s117
      %s132 = sphi 0, %s118
      %s138 = sphi 0, %s140
      %s141 = sphi 0, %s138
      %s142 = sphi 0, %s141
      %s158 = sphi 0, %s142
    $region4: #{tpu_custom_call.1} parent=1 // loop_header_branch
      %21 = sbr.rel (%p19) target = $region8
    $region5: #{tpu_custom_call.1} parent=1 // loop_body
      %s23 = ssub.s32 %s18, 1
      %s24 = ssub.s32 %s18, 2
      %s25 = sadd.s32 %s18, 1
      %s26 = ssub.s32 %s18, %s25
      %p27 = scmp.eq.s32.totalorder %s26, 0
      %s29 = sadd.s32 %s28, 1
      %s30 = scalar_select %p27, %s28, %s29
      %p33 = pneg %p27
      %p34 = scmp.eq.s32.totalorder %s18, 1
      %p35 = por %p33, %p34
      %p36 = scmp.ne.s32.totalorder %s28, %s31
      %p37 = scmp.eq.s32.totalorder %s18, 0
      %p38 = por %p36, %p37
      %p39 = scmp.ne.s32.totalorder %s28, %s31
      %p40 = scmp.eq.s32.totalorder %s23, 1
      %p41 = por %p39, %p40
      %p42 = scmp.ne.s32.totalorder %s31, %s32
      %p43 = scmp.eq.s32.totalorder %s23, 0
      %p44 = por %p42, %p43
      %p45 = scmp.ne.s32.totalorder %s31, %s32
      %p46 = scmp.eq.s32.totalorder %s24, 1
      %p47 = por %p45, %p46
      %p49 = scmp.ne.s32.totalorder %s32, %s48
      %p50 = scmp.eq.s32.totalorder %s24, 0
      %p51 = por %p49, %p50
      %s53 = sadd.s32 %s52, 1
      %p56 = scmp.eq.s32.totalorder %s18, 1
      %p57 = scmp.ne.s32.totalorder %s52, %s54
      %p58 = scmp.eq.s32.totalorder %s18, 0
      %p59 = por %p57, %p58
      %p60 = scmp.ne.s32.totalorder %s52, %s54
      %p61 = scmp.eq.s32.totalorder %s23, 1
      %p62 = por %p60, %p61
      %p63 = scmp.ne.s32.totalorder %s54, %s55
      %p64 = scmp.eq.s32.totalorder %s23, 0
      %p65 = por %p63, %p64
      %p66 = scmp.ne.s32.totalorder %s54, %s55
      %p67 = scmp.eq.s32.totalorder %s24, 1
      %p68 = por %p66, %p67
      %p70 = scmp.ne.s32.totalorder %s55, %s69
      %p71 = scmp.eq.s32.totalorder %s24, 0
      %p72 = por %p70, %p71
      %s74 = sadd.s32 %s73, 1
      %p77 = scmp.eq.s32.totalorder %s18, 1
      %p78 = scmp.ne.s32.totalorder %s73, %s75
      %p79 = scmp.eq.s32.totalorder %s18, 0
      %p80 = por %p78, %p79
      %p81 = scmp.ne.s32.totalorder %s73, %s75
      %p82 = scmp.eq.s32.totalorder %s23, 1
      %p83 = por %p81, %p82
      %p84 = scmp.ne.s32.totalorder %s75, %s76
      %p85 = scmp.eq.s32.totalorder %s23, 0
      %p86 = por %p84, %p85
      %p87 = scmp.ne.s32.totalorder %s75, %s76
      %p88 = scmp.eq.s32.totalorder %s24, 1
      %p89 = por %p87, %p88
      %p91 = scmp.ne.s32.totalorder %s76, %s90
      %p92 = scmp.eq.s32.totalorder %s24, 0
      %p93 = por %p91, %p92
      %s95 = sadd.s32 %s94, 1
      %p98 = scmp.eq.s32.totalorder %s18, 1
      %p99 = scmp.ne.s32.totalorder %s94, %s96
      %p100 = scmp.eq.s32.totalorder %s18, 0
      %p101 = por %p99, %p100
      %p102 = scmp.ne.s32.totalorder %s94, %s96
      %p103 = scmp.eq.s32.totalorder %s23, 1
      %p104 = por %p102, %p103
      %p105 = scmp.ne.s32.totalorder %s96, %s97
      %p106 = scmp.eq.s32.totalorder %s23, 0
      %p107 = por %p105, %p106
      %p108 = scmp.ne.s32.totalorder %s96, %s97
      %p109 = scmp.eq.s32.totalorder %s24, 1
      %p110 = por %p108, %p109
      %p112 = scmp.ne.s32.totalorder %s97, %s111
      %p113 = scmp.eq.s32.totalorder %s24, 0
      %p114 = por %p112, %p113
      %s116 = sadd.s32 %s115, 1
      %p119 = scmp.eq.s32.totalorder %s18, 1
      %p120 = scmp.ne.s32.totalorder %s115, %s117
      %p121 = scmp.eq.s32.totalorder %s18, 0
      %p122 = por %p120, %p121
      %p123 = scmp.ne.s32.totalorder %s115, %s117
      %p124 = scmp.eq.s32.totalorder %s23, 1
      %p125 = por %p123, %p124
      %p126 = scmp.ne.s32.totalorder %s117, %s118
      %p127 = scmp.eq.s32.totalorder %s23, 0
      %p128 = por %p126, %p127
      %p129 = scmp.ne.s32.totalorder %s117, %s118
      %p130 = scmp.eq.s32.totalorder %s24, 1
      %p131 = por %p129, %p130
      %p133 = scmp.ne.s32.totalorder %s118, %s132
      %p134 = scmp.eq.s32.totalorder %s24, 0
      %p135 = por %p133, %p134
      %s136 = ssub.s32 %s18, %s25
      %p137 = scmp.eq.s32.totalorder %s136, 0
      %s139 = sadd.s32 %s138, 1
      %s140 = scalar_select %p137, %s138, %s139
      %p143 = pneg %p137
      %p144 = scmp.eq.s32.totalorder %s18, 1
      %p145 = por %p143, %p144
      %p146 = scmp.ne.s32.totalorder %s138, %s141
      %p147 = scmp.eq.s32.totalorder %s18, 0
      %p148 = por %p146, %p147
      %p149 = scmp.ne.s32.totalorder %s138, %s141
      %p150 = scmp.eq.s32.totalorder %s23, 1
      %p151 = por %p149, %p150
      %p152 = scmp.ne.s32.totalorder %s141, %s142
      %p153 = scmp.eq.s32.totalorder %s23, 0
      %p154 = por %p152, %p153
      %p155 = scmp.ne.s32.totalorder %s141, %s142
      %p156 = scmp.eq.s32.totalorder %s24, 1
      %p157 = por %p155, %p156
      %p159 = scmp.ne.s32.totalorder %s142, %s158
      %p160 = scmp.eq.s32.totalorder %s24, 0
      %p161 = por %p159, %p160
      %p162 = scmp.le.s32.totalorder 1, %s18
      %p163 = scmp.lt.s32.totalorder %s18, 3
      %p164 = pnand %p162, %p163
      %p165 = pneg %p164
      // Predicated region
      $region9: #{tpu_custom_call.1} parent=5 // pred_check
        _
      $region10: #{tpu_custom_call.1} parent=5 // pred_check_branch
        %167 = sbr.rel (%p164) target = $region12
      $region11: #{tpu_custom_call.1} parent=5 // pred_region
        %s168 = ssub.s32 %s18, 1
        // Predicated region
        $region13: #{tpu_custom_call.1} parent=11 // pred_check
          %p169 = pneg %p65
        $region14: #{tpu_custom_call.1} parent=11 // pred_check_branch
          %171 = sbr.rel (%p169) target = $region16
        $region15: #{tpu_custom_call.1} parent=11 // pred_region
          %s173 = ssub.s32 512, 512
          %174 = vsyncadd [#allocation6], %s173
          %s175 = sshll.u32 [#allocation5], 4
          %s176 = int_to_ptr.vmem [resolvable:$true] %s175
          %181 = dma.hbm_to_vmem [thread:$0]  %s1, 512, %s176, [#allocation6], 128, 128, 8
        $region16: #{tpu_custom_call.1} parent=11 // pred_fallthru
          _
        // Predicated region
        $region17: #{tpu_custom_call.1} parent=11 // pred_check
          %p182 = pneg %p86
        $region18: #{tpu_custom_call.1} parent=11 // pred_check_branch
          %184 = sbr.rel (%p182) target = $region20
        $region19: #{tpu_custom_call.1} parent=11 // pred_region
          _
        $region20: #{tpu_custom_call.1} parent=11 // pred_fallthru
          _
        // Predicated region
        $region21: #{tpu_custom_call.1} parent=11 // pred_check
          %p185 = pneg %p107
        $region22: #{tpu_custom_call.1} parent=11 // pred_check_branch
          %187 = sbr.rel (%p185) target = $region24
        $region23: #{tpu_custom_call.1} parent=11 // pred_region
          _
        $region24: #{tpu_custom_call.1} parent=11 // pred_fallthru
          _
        // Predicated region
        $region25: #{tpu_custom_call.1} parent=11 // pred_check
          %p188 = pneg %p128
        $region26: #{tpu_custom_call.1} parent=11 // pred_check_branch
          %190 = sbr.rel (%p188) target = $region28
        $region27: #{tpu_custom_call.1} parent=11 // pred_region
          _
        $region28: #{tpu_custom_call.1} parent=11 // pred_fallthru
          _
      $region12: #{tpu_custom_call.1} parent=5 // pred_fallthru
        _
      %p191 = scmp.lt.s32.totalorder %s18, 2
      // Predicated region
      $region29: #{tpu_custom_call.1} parent=5 // pred_check
        %p192 = pneg %p191
      $region30: #{tpu_custom_call.1} parent=5 // pred_check_branch
        %194 = sbr.rel (%p192) target = $region32
      $region31: #{tpu_custom_call.1} parent=5 // pred_region
        // Predicated region
        $region33: #{tpu_custom_call.1} parent=31 // pred_check
          %p195 = pneg %p38
        $region34: #{tpu_custom_call.1} parent=31 // pred_check_branch
          %197 = sbr.rel (%p195) target = $region36
        $region35: #{tpu_custom_call.1} parent=31 // pred_region
          %s198 = sand.u32 %s28, 1
          %s199 = scalar_lea.sflag [#allocation3], %s198
          %s200 = sand.u32 %s28, 1
          %s201 = smul.addr %s200, 8
          %s202 = scalar_lea.vmem [#allocation2], %s201
          %s204 = ssub.s32 128, 128
          %205 = vsyncadd %s199, %s204
          %s206 = smul.addr %s18, 128
          %s207 = scalar_lea.hbm %s0, %s206
          %s209 = sshll.u32 %s202, 4
          %s210 = int_to_ptr.vmem [resolvable:$true] %s209
          %212 = dma.hbm_to_vmem [thread:$0]  %s207, 128, %s210, %s199
        $region36: #{tpu_custom_call.1} parent=31 // pred_fallthru
          _
      $region32: #{tpu_custom_call.1} parent=5 // pred_fallthru
        _
      %p213 = scmp.le.s32.totalorder 1, %s18
      %p214 = scmp.lt.s32.totalorder %s18, 3
      %p215 = pnand %p213, %p214
      %p216 = pneg %p215
      // Predicated region
      $region37: #{tpu_custom_call.1} parent=5 // pred_check
        _
      $region38: #{tpu_custom_call.1} parent=5 // pred_check_branch
        %218 = sbr.rel (%p215) target = $region40
      $region39: #{tpu_custom_call.1} parent=5 // pred_region
        %s219 = ssub.s32 %s18, 1
        %s220 = sand.u32 %s31, 1
        %s221 = scalar_lea.sflag [#allocation3], %s220
        %s222 = sand.u32 %s31, 1
        %s223 = smul.addr %s222, 8
        %s224 = scalar_lea.vmem [#allocation2], %s223
        // Predicated region
        $region41: #{tpu_custom_call.1} parent=39 // pred_check
          %p225 = pneg %p44
        $region42: #{tpu_custom_call.1} parent=39 // pred_check_branch
          %227 = sbr.rel (%p225) target = $region44
        $region43: #{tpu_custom_call.1} parent=39 // pred_region
          %228 = dma.done %s221, 128
        $region44: #{tpu_custom_call.1} parent=39 // pred_fallthru
          _
        // Predicated region
        $region45: #{tpu_custom_call.1} parent=39 // pred_check
          %p229 = pneg %p65
        $region46: #{tpu_custom_call.1} parent=39 // pred_check_branch
          %231 = sbr.rel (%p229) target = $region48
        $region47: #{tpu_custom_call.1} parent=39 // pred_region
          %232 = dma.done [#allocation6], 512
        $region48: #{tpu_custom_call.1} parent=39 // pred_fallthru
          _
        %s233 = sand.u32 %s31, 1
        %s234 = scalar_lea.sflag [#allocation3], %s233
        %s235 = sand.u32 %s31, 1
        %s236 = smul.addr %s235, 8
        %s237 = scalar_lea.vmem [#allocation2], %s236
        %p238 = pneg %p44
        %p239 = pneg %p41
        %p240 = pneg %p65
        %p241 = pneg %p62
        %p242 = pneg %p86
        %p243 = pneg %p83
        %p244 = pneg %p107
        %p245 = pneg %p104
        %p246 = pneg %p128
        %p247 = pneg %p125
        %p248 = pneg %p154
        %p249 = pneg %p151
        %s250 = sand.u32 %s141, 1
        %s251 = scalar_lea.sflag [#allocation4], %s250
        %s252 = sand.u32 %s141, 1
        %s253 = smul.addr %s252, 8
        %s254 = scalar_lea.vmem [#allocation7], %s253
        %v255 = vld [vmem:[%s224] sm:$0xff]
        %v256 = vld [vmem:[#allocation5] sm:$0xff]
        %v257 = vld [vmem:[#allocation5 + $0x8] sm:$0xff]
        %v258 = vld [vmem:[#allocation5 + $0x10] sm:$0xff]
        %v259 = vld [vmem:[#allocation5 + $0x18] sm:$0xff]
        %v260 = vld [vmem:[%s2] sm:$0x1]
        %v262 = vlaneseq
        %v263 = vshrl.u32 %v262, 7
        %v264 = vsub.s32 0, %v263
        %v265 = vrot.slane %v260, %v264
        %vm267 = vcmask 261120
        %v269 = vsel %vm267, %v255, 0
        %271 = vmatprep.subr.mxu0 0.0
        %272 = vmatpush1.msra.mxu0 %v256
        %273 = vmatprep.subr.mxu0 0.0
        %274 = vmatpush1.msra.mxu0 %v257
        %275 = vmatprep.subr.mxu0 0.0
        %276 = vmatpush1.msra.mxu0 %v258
        %277 = vmatprep.subr.mxu0 0.0
        %278 = vmatpush1.msra.mxu0 %v259
        %279 = vmatprep.subr.mxu0 0.0
        %280 = vmatpush1.msra.mxu0 0.0
        %281 = vmatprep.subr.mxu0 0.0
        %282 = vmatpush1.msra.mxu0 0.0
        %283 = vmatprep.subr.mxu0 0.0
        %284 = vmatpush1.msra.mxu0 0.0
        %285 = vmatprep.subr.mxu0 0.0
        %286 = vmatpush1.msra.mxu0 0.0
        %287 = vmatprep.subr.mxu0 0.0
        %288 = vmatpush1.msra.mxu0 0.0
        %289 = vmatprep.subr.mxu0 0.0
        %290 = vmatpush1.msra.mxu0 0.0
        %291 = vmatprep.subr.mxu0 0.0
        %292 = vmatpush1.msra.mxu0 0.0
        %293 = vmatprep.subr.mxu0 0.0
        %294 = vmatpush1.msra.mxu0 0.0
        %295 = vmatprep.subr.mxu0 0.0
        %296 = vmatpush1.msra.mxu0 0.0
        %297 = vmatprep.subr.mxu0 0.0
        %298 = vmatpush1.msra.mxu0 0.0
        %299 = vmatprep.subr.mxu0 0.0
        %300 = vmatpush1.msra.mxu0 0.0
        %301 = vmatprep.subr.mxu0 0.0
        %302 = vmatpush1.msra.mxu0 0.0
        %303 = vmatprep.subr.mxu0 0.0
        %304 = vmatpush1.msra.mxu0 0.0
        %305 = vmatprep.subr.mxu0 0.0
        %306 = vmatpush1.msra.mxu0 0.0
        %307 = vmatprep.subr.mxu0 0.0
        %308 = vmatpush1.msra.mxu0 0.0
        %309 = vmatprep.subr.mxu0 0.0
        %310 = vmatpush1.msra.mxu0 0.0
        %311 = vmatprep.subr.mxu0 0.0
        %312 = vmatpush1.msra.mxu0 0.0
        %313 = vmatprep.subr.mxu0 0.0
        %314 = vmatpush1.msra.mxu0 0.0
        %315 = vmatprep.subr.mxu0 0.0
        %316 = vmatpush1.msra.mxu0 0.0
        %317 = vmatprep.subr.mxu0 0.0
        %318 = vmatpush1.msra.mxu0 0.0
        %319 = vmatprep.subr.mxu0 0.0
        %320 = vmatpush1.msra.mxu0 0.0
        %321 = vmatprep.subr.mxu0 0.0
        %322 = vmatpush1.msra.mxu0 0.0
        %323 = vmatprep.subr.mxu0 0.0
        %324 = vmatpush1.msra.mxu0 0.0
        %325 = vmatprep.subr.mxu0 0.0
        %326 = vmatpush1.msra.mxu0 0.0
        %327 = vmatprep.subr.mxu0 0.0
        %328 = vmatpush1.msra.mxu0 0.0
        %329 = vmatprep.subr.mxu0 0.0
        %330 = vmatpush1.msra.mxu0 0.0
        %331 = vmatprep.subr.mxu0 0.0
        %332 = vmatpush1.msra.mxu0 0.0
        %333 = vmatprep.subr.mxu0 0.0
        %334 = vmatpush1.msra.mxu0 0.0
        %335 = vmatprep.mubr.f32.mxu0 0.0
        %336 = vmatmul.mubr.f32.gmra.mrb[0].mxu0 %v269
        %v337 = vpop.f32.mrb[0].mxu0
        %v338 = vadd.f32 %v265, %v337
        %v339 = vpop.f32.mrb[0].mxu0
        %340 = vdwg.mxu0
        %v341 = vmul.f32 %v338, 0.5
        %v342 = vmul.f32 %v338, 0.70710677
        %v343 = verf.f32.pop %v342
        %v344 = vadd.f32 %v343, 1.0
        %v345 = vmul.f32 %v341, %v344
        %v346 = vsel %vm267, %v345, 0.0
        %347 = vadd.xlane.f32.xlu0 %v346
        %v348 = vpop.xlane.xlu0 %347
        %v349 = vrcp.pop 32.0
        %v350 = vmul.f32 %v348, %v349
        %v351 = vsub.f32 %v345, %v350
        %v352 = vmul.f32 %v351, %v351
        %v353 = vsel %vm267, %v352, 0.0
        %354 = vadd.xlane.f32.xlu0 %v353
        %v355 = vpop.xlane.xlu0 %354
        %v356 = vmul.f32 %v355, %v349
        %v357 = vadd.f32 %v356, 1e-12
        %v358 = vrsqrt.pop %v357
        %v359 = vmul.f32 %v351, %v358
        %v360 = vld [vmem:[%s3] sm:$0x1]
        %v362 = vlaneseq
        %v363 = vshrl.u32 %v362, 7
        %v364 = vsub.s32 0, %v363
        %v365 = vrot.slane %v360, %v364
        %v367 = vmul.f32 %v359, %v365
        %v368 = vld [vmem:[%s4] sm:$0x1]
        %v370 = vlaneseq
        %v371 = vshrl.u32 %v370, 7
        %v372 = vsub.s32 0, %v371
        %v373 = vrot.slane %v368, %v372
        %v375 = vadd.f32 %v367, %v373
        %376 = vst.msk [vmem:[%s254] sm:$0xff] %vm267, %v375
        %s377 = sand.u32 %s141, 1
        %s378 = scalar_lea.sflag [#allocation4], %s377
        %s379 = sand.u32 %s141, 1
        %s380 = smul.addr %s379, 8
        %s381 = scalar_lea.vmem [#allocation7], %s380
        // Predicated region
        $region49: #{tpu_custom_call.1} parent=39 // pred_check
          %p382 = pneg %p151
        $region50: #{tpu_custom_call.1} parent=39 // pred_check_branch
          %384 = sbr.rel (%p382) target = $region52
        $region51: #{tpu_custom_call.1} parent=39 // pred_region
          %s386 = ssub.s32 128, 128
          %387 = vsyncadd %s378, %s386
          %s388 = smul.addr %s23, 128
          %s389 = scalar_lea.hbm %s5, %s388
          %s391 = sshll.u32 %s381, 4
          %s392 = int_to_ptr.vmem [resolvable:$true] %s391
          %394 = dma.vmem_to_hbm [thread:$0]  %s392, 128, %s389, %s378
        $region52: #{tpu_custom_call.1} parent=39 // pred_fallthru
          _
      $region40: #{tpu_custom_call.1} parent=5 // pred_fallthru
        _
      %p395 = scmp.le.s32.totalorder 2, %s18
      // Predicated region
      $region53: #{tpu_custom_call.1} parent=5 // pred_check
        %p396 = pneg %p395
      $region54: #{tpu_custom_call.1} parent=5 // pred_check_branch
        %398 = sbr.rel (%p396) target = $region56
      $region55: #{tpu_custom_call.1} parent=5 // pred_region
        %s399 = ssub.s32 %s18, 2
        // Predicated region
        $region57: #{tpu_custom_call.1} parent=55 // pred_check
          %p400 = pneg %p157
        $region58: #{tpu_custom_call.1} parent=55 // pred_check_branch
          %402 = sbr.rel (%p400) target = $region60
        $region59: #{tpu_custom_call.1} parent=55 // pred_region
          %s403 = sand.u32 %s142, 1
          %s404 = scalar_lea.sflag [#allocation4], %s403
          %s405 = sand.u32 %s142, 1
          %s406 = smul.addr %s405, 8
          %s407 = scalar_lea.vmem [#allocation7], %s406
          %408 = dma.done %s404, 128
        $region60: #{tpu_custom_call.1} parent=55 // pred_fallthru
          _
      $region56: #{tpu_custom_call.1} parent=5 // pred_fallthru
        _
    $region6: #{tpu_custom_call.1} parent=1 // loop_footer
      %s22 = sadd.s32 1, %s18
    $region7: #{tpu_custom_call.1} parent=1 // loop_footer_branch
      %17 = sbr.rel target = $region3
    $region8: #{tpu_custom_call.1} parent=1 // loop_exit
      _
    %409 = vsyncpa [#allocation3], 1
    %s410 = scalar_lea.sflag [#allocation3], 1
    %411 = vsyncpa %s410, 1
    %412 = vsyncpa [#allocation6], 1
    %413 = vsyncpa [#allocation4], 1
    %s414 = scalar_lea.sflag [#allocation4], 1
    %415 = vsyncpa %s414, 1

</llo_original>
